<compile_context>
chip_gen: v5e
topology: v5e:2x2
jax: 0.10.0
libtpu: 0.0.40
codegen_flags: <defaults>
</compile_context>

<pallas_src>
import functools

import jax
import jax.numpy as jnp
from jax.experimental import pallas as pl
from jax.experimental.pallas import tpu as pltpu


def _cdiv(a, b):
    return -(-a // b)


def _round_up(a, b):
    return _cdiv(a, b) * b


def _gelu_dtype(x_dtype):
    """bf16 gelu on bf16 inputs for chips with bf16 VALU/EUP; f32 otherwise."""
    if x_dtype != jnp.bfloat16:
        return jnp.float32
    try:
        kind = jax.devices()[0].device_kind.lower()
    except Exception:  # pragma: no cover
        kind = ""
    if "v5 lite" in kind or "v5e" in kind or "v5litepod" in kind:
        return jnp.float32  # v5e has no bf16 VPU/EUP
    return jnp.bfloat16


def _mlp_kernel(tile_ids_ref, group_ids_ref, lo_ref, hi_ref,
                x_ref, w1_ref, w2_ref, o_ref, *scratch,
                act_dtype, num_f_tiles):
    """One (work_item, f_tile) grid step of the fused grouped MLP."""
    del tile_ids_ref, group_ids_ref  # only used by the index_maps
    acc_ref = scratch[0] if scratch else None
    w = pl.program_id(0)
    k = pl.program_id(1)

    # First GEMM (MXU, f32 accumulation), activation, second-GEMM partial.
    h = jnp.dot(x_ref[...], w1_ref[...], preferred_element_type=jnp.float32)
    a = jax.nn.gelu(h.astype(act_dtype), approximate=True)
    p = jnp.dot(a.astype(w2_ref.dtype), w2_ref[...],
                preferred_element_type=jnp.float32)

    def _merge(val):
        # Masked merge: only this work item's group-owned rows are written.
        # Rows owned by other groups sharing this row tile are written by
        # their own (consecutive) work items into the same resident output
        # block before it is flushed to HBM.
        rows = jax.lax.broadcasted_iota(jnp.int32, (val.shape[0], 1), 0)
        mask = (rows >= lo_ref[w]) & (rows < hi_ref[w])
        o_ref[...] = jnp.where(mask, val.astype(o_ref.dtype), o_ref[...])

    if num_f_tiles == 1:
        # Fast path: no accumulator scratch; weight blocks stay resident
        # across consecutive work items of the same expert.
        _merge(p)
    else:
        @pl.when(k == 0)
        def _():
            acc_ref[...] = jnp.zeros_like(acc_ref)

        acc_ref[...] += p

        @pl.when(k == num_f_tiles - 1)
        def _():
            _merge(acc_ref[...])


def unpadded_mlp(x, w1, w2, sizes, *, tm=512, tn=512):
    """Pallas grouped-GEMM MLP (UnPaddedMLP.forward).

    x:     (T, H), rows grouped contiguously by packed expert (unpadded).
    w1:    (E, H, F), w2: (E, F, H).
    sizes: list of (num_tokens, hidden, ffn) per packed expert; Python ints
           (static metadata, as in megablocks).
    """
    T, H = x.shape
    E, H2, F = w1.shape
    assert H2 == H and w2.shape == (E, F, H)
    token_counts = [int(s[0]) for s in sizes]
    assert len(token_counts) == E
    assert sum(token_counts) == T

    if T == 0:
        return jnp.zeros((0, H), dtype=x.dtype)

    xb = x.dtype.itemsize
    wb = w1.dtype.itemsize
    ob = xb
    act_dtype = _gelu_dtype(x.dtype)
    act_b = jnp.dtype(act_dtype).itemsize

    # --- Generation-aware VMEM budget (v7x: 64 MiB per TC; v5e/v6e: 128). ---
    try:
        vmem_cap = int(pltpu.get_tpu_info().vmem_capacity_bytes)
    except Exception:  # pragma: no cover - conservative fallback
        vmem_cap = 64 * 1024 * 1024
    vmem_budget = int(vmem_cap * 0.8)   # tile-selection budget
    vmem_limit = int(vmem_cap * 0.9)    # scoped limit handed to Mosaic

    def _vmem_bytes(tm_, tn_, with_acc):
        return (2 * tm_ * H * xb                      # x tile (double buffer)
                + 2 * H * tn_ * wb                    # w1 slab
                + 2 * tn_ * H * wb                    # w2 slab
                + 2 * tm_ * H * ob                    # out tile
                + (tm_ * H * 4 if with_acc else 0)    # f32 accumulator
                + tm_ * tn_ * (4 + act_b)             # h / gelu intermediates
                + tm_ * H * 4)                        # second-GEMM partial

    # --- Row tile: multiple of 128; shrink only if even tn=128 won't fit. ---
    tm = max(128, min(tm, _round_up(T, 128)))
    min_tn = 128 if F % 128 == 0 else min(F, 128)
    while tm > 128 and _vmem_bytes(tm, min_tn, True) > vmem_budget:
        tm //= 2

    # --- FFN tile: prefer the whole F (weight residency + no accumulator)
    #     when it fits; else the largest multiple-of-128 divisor of F that
    #     fits the budget. ---
    tn_req = max(128, min(tn, F))
    if tn_req >= F and _vmem_bytes(tm, F, False) <= vmem_budget:
        tn = F
    elif F % 128 == 0:
        tn = None
        c = (min(tn_req, F) // 128) * 128
        while c >= 128:
            if F % c == 0 and _vmem_bytes(tm, c, True) <= vmem_budget:
                tn = c
                break
            c -= 128
        if tn is None:
            # Nothing fits the soft budget: take the smallest valid divisor
            # and let the scoped limit decide.
            c = 128
            while F % c != 0:
                c += 128
            tn = c
    else:
        # TODO(synk): masked edge F-tiles for F not a multiple of 128.
        tn = F
    num_f_tiles = F // tn

    # --- gmm-style work-item metadata (all static: sizes is a Python list).
    #     Work item = (row tile, overlapping expert); a row tile straddling a
    #     group boundary is visited once per group and merged with a mask. ---
    offsets = [0]
    for n in token_counts:
        offsets.append(offsets[-1] + n)
    num_row_tiles = _cdiv(T, tm)
    tiles, gid_list, los, his = [], [], [], []
    for t in range(num_row_tiles):
        r0, r1 = t * tm, min((t + 1) * tm, T)
        for e in range(E):
            g0, g1 = offsets[e], offsets[e + 1]
            lo, hi = max(r0, g0), min(r1, g1)
            if lo < hi:
                tiles.append(t)
                gid_list.append(e)
                los.append(lo - r0)
                his.append(hi - r0)
    num_work = len(tiles)
    assert num_work >= 1

    tile_ids = jnp.asarray(tiles, dtype=jnp.int32)
    group_ids = jnp.asarray(gid_list, dtype=jnp.int32)
    row_lo = jnp.asarray(los, dtype=jnp.int32)
    row_hi = jnp.asarray(his, dtype=jnp.int32)

    grid_spec = pltpu.PrefetchScalarGridSpec(
        num_scalar_prefetch=4,
        grid=(num_work, num_f_tiles),
        in_specs=[
            pl.BlockSpec((tm, H), lambda w, k, t, g, lo, hi: (t[w], 0)),
            # Leading expert dim squeezed (None) -> kernel sees (H,tn)/(tn,H).
            pl.BlockSpec((None, H, tn), lambda w, k, t, g, lo, hi: (g[w], 0, k)),
            pl.BlockSpec((None, tn, H), lambda w, k, t, g, lo, hi: (g[w], k, 0)),
        ],
        out_specs=pl.BlockSpec((tm, H), lambda w, k, t, g, lo, hi: (t[w], 0)),
        scratch_shapes=([] if num_f_tiles == 1
                        else [pltpu.VMEM((tm, H), jnp.float32)]),
    )

    # Honest byte accounting: with F tiled, weights are streamed once per work
    # item; with num_f_tiles == 1 they stay resident until the expert changes.
    if num_f_tiles == 1:
        weight_streams = 1 + sum(
            int(gid_list[i] != gid_list[i - 1]) for i in range(1, num_work))
    else:
        weight_streams = num_work
    cost = pl.CostEstimate(
        flops=int(4 * num_work * tm * H * F),
        transcendentals=int(num_work * tm * F),
        bytes_accessed=int(num_row_tiles * tm * H * xb
                           + weight_streams * 2 * H * F * wb
                           + T * H * ob),
    )

    kernel = functools.partial(_mlp_kernel, act_dtype=act_dtype,
                               num_f_tiles=num_f_tiles)

    return pl.pallas_call(
        kernel,
        grid_spec=grid_spec,
        out_shape=jax.ShapeDtypeStruct((T, H), x.dtype),
        compiler_params=pltpu.CompilerParams(
            # Work-item axis must stay sequential: consecutive work items that
            # share a row tile merge into the same resident output block.
            dimension_semantics=("arbitrary", "arbitrary"),
            vmem_limit_bytes=vmem_limit,
        ),
        cost_estimate=cost,
    )(tile_ids, group_ids, row_lo, row_hi, x, w1, w2)


def _reference(x, w1, w2, sizes):
    outs, off = [], 0
    for e, (n, _, _) in enumerate(sizes):
        xg = x[off:off + n]
        h = jax.nn.gelu(jnp.dot(xg, w1[e]), approximate=True)
        outs.append(jnp.dot(h, w2[e]))
        off += n
    return jnp.concatenate(outs, axis=0)


if __name__ == "__main__":
    key = jax.random.PRNGKey(0)
    k_x, k_w1, k_w2 = jax.random.split(key, 3)

    # Small shapes: 2 packed experts, hidden=128, ffn_hidden=256, ragged
    # per-expert token counts [160, 72] (unpadded, concatenated by expert).
    E, H, F = 2, 128, 256
    token_counts = [160, 72]
    T = sum(token_counts)
    sizes = [(n, H, F) for n in token_counts]

    x = jax.random.normal(k_x, (T, H), dtype=jnp.float32)
    # deterministic "init_method" / "output_layer_init_method" stand-ins
    w1 = 0.02 * jax.random.normal(k_w1, (E, H, F), dtype=jnp.float32)
    w2 = 0.02 * jax.random.normal(k_w2, (E, F, H), dtype=jnp.float32)

    ref = _reference(x, w1, w2, sizes)

    # (a) tiled-F path: tn=128 -> 2 F tiles, f32 accumulator scratch,
    #     multi-group row tile and ragged edge tile exercised.
    out_a = jax.block_until_ready(unpadded_mlp(x, w1, w2, sizes, tm=128, tn=128))
    # (b) single-F-tile fast path: tn=F -> weight residency, no scratch.
    out_b = jax.block_until_ready(unpadded_mlp(x, w1, w2, sizes, tm=128, tn=256))

    assert out_a.shape == (T, H) and out_b.shape == (T, H)
    assert jnp.allclose(out_a, ref, atol=1e-5, rtol=1e-5), "mismatch (tiled F)"
    assert jnp.allclose(out_b, ref, atol=1e-5, rtol=1e-5), "mismatch (full F)"

    print("KERNEL_OK")
</pallas_src>

<mosaic_0001>
module attributes {stable_mosaic.version = 11 : i64} {
  func.func @_mlp_kernel(%arg0: i32, %arg1: i32, %arg2: memref<3xi32, #tpu.memory_space<smem>>, %arg3: memref<3xi32, #tpu.memory_space<smem>>, %arg4: memref<3xi32, #tpu.memory_space<smem>>, %arg5: memref<3xi32, #tpu.memory_space<smem>>, %arg6: memref<128x128xf32, #tpu.memory_space<vmem>>, %arg7: memref<1x128x128xf32, #tpu.memory_space<vmem>>, %arg8: memref<1x128x128xf32, #tpu.memory_space<vmem>>, %arg9: memref<128x128xf32, #tpu.memory_space<vmem>>, %arg10: memref<128x128xf32, #tpu.memory_space<vmem>>) attributes {dimension_semantics = [#tpu.dimension_semantics<arbitrary>, #tpu.dimension_semantics<arbitrary>], iteration_bounds = array<i64: 3, 2>, scalar_prefetch = 4 : i64, scratch_operands = 1 : i64, tpu.core_type = #tpu.core_type<tc>, window_params = [{transform_indices = @transform_0, window_bounds = array<i64: 128, 128>}, {transform_indices = @transform_1, window_bounds = array<i64: 1, 128, 128>}, {transform_indices = @transform_2, window_bounds = array<i64: 1, 128, 128>}, {transform_indices = @transform_3, window_bounds = array<i64: 128, 128>}]} {
    %c0 = arith.constant 0 : index
    %c0_0 = arith.constant 0 : index
    %0 = vector.load %arg6[%c0, %c0_0] : memref<128x128xf32, #tpu.memory_space<vmem>>, vector<128x128xf32>
    %c0_1 = arith.constant 0 : index
    %c0_2 = arith.constant 0 : index
    %c0_3 = arith.constant 0 : index
    %1 = vector.load %arg7[%c0_1, %c0_2, %c0_3] : memref<1x128x128xf32, #tpu.memory_space<vmem>>, vector<1x128x128xf32>
    %2 = vector.shape_cast %1 : vector<1x128x128xf32> to vector<128x128xf32>
    %cst = arith.constant dense<0.000000e+00> : vector<128x128xf32>
    %3 = tpu.matmul %0, %2, %cst {dimension_numbers = #tpu.dot_dimension_numbers<[1], [0], [0], [1], [0, 0, 1, 1], [], []>} : vector<128x128xf32>, vector<128x128xf32>, vector<128x128xf32> -> vector<128x128xf32>
    %4 = arith.mulf %3, %3 : vector<128x128xf32>
    %5 = arith.mulf %3, %4 : vector<128x128xf32>
    %cst_4 = arith.constant 4.471500e-02 : f32
    %6 = vector.broadcast %cst_4 : f32 to vector<128x128xf32>
    %7 = arith.mulf %6, %5 : vector<128x128xf32>
    %8 = arith.addf %3, %7 : vector<128x128xf32>
    %cst_5 = arith.constant 0.797884583 : f32
    %9 = vector.broadcast %cst_5 : f32 to vector<128x128xf32>
    %10 = arith.mulf %9, %8 : vector<128x128xf32>
    %11 = math.tanh %10 : vector<128x128xf32>
    %cst_6 = arith.constant 1.000000e+00 : f32
    %12 = vector.broadcast %cst_6 : f32 to vector<128x128xf32>
    %13 = arith.addf %12, %11 : vector<128x128xf32>
    %cst_7 = arith.constant 5.000000e-01 : f32
    %14 = vector.broadcast %cst_7 : f32 to vector<128x128xf32>
    %15 = arith.mulf %14, %13 : vector<128x128xf32>
    %16 = arith.mulf %3, %15 : vector<128x128xf32>
    %c0_8 = arith.constant 0 : index
    %c0_9 = arith.constant 0 : index
    %c0_10 = arith.constant 0 : index
    %17 = vector.load %arg8[%c0_8, %c0_9, %c0_10] : memref<1x128x128xf32, #tpu.memory_space<vmem>>, vector<1x128x128xf32>
    %18 = vector.shape_cast %17 : vector<1x128x128xf32> to vector<128x128xf32>
    %cst_11 = arith.constant dense<0.000000e+00> : vector<128x128xf32>
    %19 = tpu.matmul %16, %18, %cst_11 {dimension_numbers = #tpu.dot_dimension_numbers<[1], [0], [0], [1], [0, 0, 1, 1], [], []>} : vector<128x128xf32>, vector<128x128xf32>, vector<128x128xf32> -> vector<128x128xf32>
    %c0_i32 = arith.constant 0 : i32
    %20 = arith.cmpi eq, %arg1, %c0_i32 : i32
    %21 = arith.extui %20 : i1 to i32
    %c0_i32_12 = arith.constant 0 : i32
    %22 = arith.cmpi ne, %21, %c0_i32_12 : i32
    scf.if %22 {
      %cst_18 = arith.constant 0.000000e+00 : f32
      %29 = vector.broadcast %cst_18 : f32 to vector<128x128xf32>
      %c0_19 = arith.constant 0 : index
      %c0_20 = arith.constant 0 : index
      %30 = vector.load %arg10[%c0_19, %c0_20] : memref<128x128xf32, #tpu.memory_space<vmem>>, vector<128x128xf32>
      tpu.vector_store %arg10[%c0_19, %c0_20], %29 {strides = array<i32>} : memref<128x128xf32, #tpu.memory_space<vmem>>, vector<128x128xf32>,
    } else {
    }
    %c0_13 = arith.constant 0 : index
    %c0_14 = arith.constant 0 : index
    %23 = vector.load %arg10[%c0_13, %c0_14] : memref<128x128xf32, #tpu.memory_space<vmem>>, vector<128x128xf32>
    %24 = arith.addf %23, %19 : vector<128x128xf32>
    %c0_15 = arith.constant 0 : index
    %c0_16 = arith.constant 0 : index
    %25 = vector.load %arg10[%c0_15, %c0_16] : memref<128x128xf32, #tpu.memory_space<vmem>>, vector<128x128xf32>
    tpu.vector_store %arg10[%c0_15, %c0_16], %24 {strides = array<i32>} : memref<128x128xf32, #tpu.memory_space<vmem>>, vector<128x128xf32>,
    %c1_i32 = arith.constant 1 : i32
    %26 = arith.cmpi eq, %arg1, %c1_i32 : i32
    %27 = arith.extui %26 : i1 to i32
    %c0_i32_17 = arith.constant 0 : i32
    %28 = arith.cmpi ne, %27, %c0_i32_17 : i32
    scf.if %28 {
      %c0_18 = arith.constant 0 : index
      %c0_19 = arith.constant 0 : index
      %29 = vector.load %arg10[%c0_18, %c0_19] : memref<128x128xf32, #tpu.memory_space<vmem>>, vector<128x128xf32>
      %30 = tpu.iota {dimensions = array<i32: 0>} : vector<128x1xi32>
      %31 = arith.index_cast %arg0 : i32 to index
      %32 = memref.load %arg4[%31] : memref<3xi32, #tpu.memory_space<smem>>
      %33 = vector.broadcast %32 : i32 to vector<128x1xi32>
      %34 = arith.cmpi sge, %30, %33 : vector<128x1xi32>
      %35 = arith.index_cast %arg0 : i32 to index
      %36 = memref.load %arg5[%35] : memref<3xi32, #tpu.memory_space<smem>>
      %37 = vector.broadcast %36 : i32 to vector<128x1xi32>
      %38 = arith.cmpi slt, %30, %37 : vector<128x1xi32>
      %39 = arith.andi %34, %38 : vector<128x1xi1>
      %c0_20 = arith.constant 0 : index
      %c0_21 = arith.constant 0 : index
      %40 = vector.load %arg9[%c0_20, %c0_21] : memref<128x128xf32, #tpu.memory_space<vmem>>, vector<128x128xf32>
      %41 = vector.shape_cast %39 : vector<128x1xi1> to vector<128x1xi1>
      %42 = vector.broadcast %41 : vector<128x1xi1> to vector<128x128xi1>
      %43 = arith.select %42, %29, %40 : vector<128x128xi1>, vector<128x128xf32>
      %c0_22 = arith.constant 0 : index
      %c0_23 = arith.constant 0 : index
      %44 = vector.load %arg9[%c0_22, %c0_23] : memref<128x128xf32, #tpu.memory_space<vmem>>, vector<128x128xf32>
      tpu.vector_store %arg9[%c0_22, %c0_23], %43 {strides = array<i32>} : memref<128x128xf32, #tpu.memory_space<vmem>>, vector<128x128xf32>,
    } else {
    }
    return
  }
  func.func @transform_0(%arg0: i32, %arg1: i32, %arg2: memref<3xi32, #tpu.memory_space<smem>>, %arg3: memref<3xi32, #tpu.memory_space<smem>>, %arg4: memref<3xi32, #tpu.memory_space<smem>>, %arg5: memref<3xi32, #tpu.memory_space<smem>>) -> (i32, i32) {
    %0 = arith.index_cast %arg0 : i32 to index
    %1 = memref.load %arg2[%0] : memref<3xi32, #tpu.memory_space<smem>>
    %c0_i32 = arith.constant 0 : i32
    %c0_i32_0 = arith.constant 0 : i32
    return %1, %c0_i32 : i32, i32
  }
  func.func @transform_1(%arg0: i32, %arg1: i32, %arg2: memref<3xi32, #tpu.memory_space<smem>>, %arg3: memref<3xi32, #tpu.memory_space<smem>>, %arg4: memref<3xi32, #tpu.memory_space<smem>>, %arg5: memref<3xi32, #tpu.memory_space<smem>>) -> (i32, i32, i32) {
    %0 = arith.index_cast %arg0 : i32 to index
    %1 = memref.load %arg3[%0] : memref<3xi32, #tpu.memory_space<smem>>
    %c0_i32 = arith.constant 0 : i32
    %c0_i32_0 = arith.constant 0 : i32
    return %1, %c0_i32, %arg1 : i32, i32, i32
  }
  func.func @transform_2(%arg0: i32, %arg1: i32, %arg2: memref<3xi32, #tpu.memory_space<smem>>, %arg3: memref<3xi32, #tpu.memory_space<smem>>, %arg4: memref<3xi32, #tpu.memory_space<smem>>, %arg5: memref<3xi32, #tpu.memory_space<smem>>) -> (i32, i32, i32) {
    %0 = arith.index_cast %arg0 : i32 to index
    %1 = memref.load %arg3[%0] : memref<3xi32, #tpu.memory_space<smem>>
    %c0_i32 = arith.constant 0 : i32
    %c0_i32_0 = arith.constant 0 : i32
    return %1, %arg1, %c0_i32 : i32, i32, i32
  }
  func.func @transform_3(%arg0: i32, %arg1: i32, %arg2: memref<3xi32, #tpu.memory_space<smem>>, %arg3: memref<3xi32, #tpu.memory_space<smem>>, %arg4: memref<3xi32, #tpu.memory_space<smem>>, %arg5: memref<3xi32, #tpu.memory_space<smem>>) -> (i32, i32) {
    %0 = arith.index_cast %arg0 : i32 to index
    %1 = memref.load %arg2[%0] : memref<3xi32, #tpu.memory_space<smem>>
    %c0_i32 = arith.constant 0 : i32
    %c0_i32_0 = arith.constant 0 : i32
    return %1, %c0_i32 : i32, i32
  }
}

</mosaic_0001>

<llo_original>
// kernel: tpu_custom_call.1
$region0: #{tpu_custom_call.1}
  #allocation0 [shape = 'u32[]', space=smem, size = 0x4, offset = 0x4, fixed_abs, tag = 'smem constant byte address 0x4 - core index']
  #allocation1 [shape = 'u32[72,128]{1,0:T(1,128)}', space=vmem, size = 0x9000, scoped, tag = 'internal scratch']
  #allocation2 [shape = 'f32[128,128]{1,0:T(8,128)}', space=vmem, size = 0x10000, scoped, tag = 'scratch operand']
  #allocation3 [shape = 's32[1]{0}', space=sflag, size = 0x4, scoped, tag = 'scoped memory for tpu_custom_call.1']
  #allocation4 [shape = 'u8[512]{0}', space=smem, size = 0x200, scoped, tag = 'prefetched SMEM operand 0']
  #allocation5 [shape = 'u8[512]{0}', space=smem, size = 0x200, scoped, tag = 'prefetched SMEM operand 1']
  #allocation6 [shape = 'u8[512]{0}', space=smem, size = 0x200, scoped, tag = 'prefetched SMEM operand 2']
  #allocation7 [shape = 'u8[512]{0}', space=smem, size = 0x200, scoped, tag = 'prefetched SMEM operand 3']
  %s0 = inlined_call_operand.hbm [shape: s32[3], index: 0, kind: input, shape index: {}]
  %s1 = inlined_call_operand.hbm [shape: s32[3], index: 1, kind: input, shape index: {}]
  %s2 = inlined_call_operand.vmem [shape: s32[3], index: 2, kind: input, shape index: {}]
  %s3 = inlined_call_operand.vmem [shape: s32[3], index: 3, kind: input, shape index: {}]
  %s4 = inlined_call_operand.hbm [shape: f32[232,128], index: 4, kind: input, shape index: {}]
  %s5 = inlined_call_operand.hbm [shape: f32[2,128,256], index: 5, kind: input, shape index: {}]
  %s6 = inlined_call_operand.hbm [shape: f32[2,256,128], index: 6, kind: input, shape index: {}]
  %s7 = inlined_call_operand.hbm [shape: f32[232,128], index: 7, kind: output, shape index: {}]
  %s8 = sld [smem:[#allocation0]]
  $region65: #{tpu_custom_call.1} parent=0
    _
  %s10 = ssub.s32 1, %s8
  %s11 = scalar_select 0, %s10, %s8
  %s13 = sshll.u32 %s0, 4
  %s14 = int_to_ptr.hbm [resolvable:$true] %s13
  %16 = dma.hbm_to_smem %s14, 16, [#allocation4], [#allocation3]
  %s18 = sshll.u32 %s1, 4
  %s19 = int_to_ptr.hbm [resolvable:$true] %s18
  %21 = dma.hbm_to_smem %s19, 16, [#allocation5], [#allocation3]
  %s23 = sshll.u32 %s2, 4
  %s24 = int_to_ptr.vmem [resolvable:$true] %s23
  %26 = dma.vmem_to_smem %s24, 16, [#allocation6], [#allocation3]
  %s28 = sshll.u32 %s3, 4
  %s29 = int_to_ptr.vmem [resolvable:$true] %s28
  %31 = dma.vmem_to_smem %s29, 16, [#allocation7], [#allocation3]
  %33 = dma.done [#allocation3], 64
  %34 = sfence
  $region1: #{tpu_custom_call.1} parent=0
    #allocation8 [shape = 'u8[131072]{0}', space=vmem, size = 0x20000, scoped, tag = 'input window, operand 4']
    #allocation9 [shape = 's32[2]{0}', space=sflag, size = 0x8, scoped, tag = 'scoped memory for tpu_custom_call.1']
    #allocation10 [shape = 's32[2]{0}', space=sflag, size = 0x8, scoped, tag = 'scoped memory for tpu_custom_call.1']
    #allocation11 [shape = 'u8[131072]{0}', space=vmem, size = 0x20000, scoped, tag = 'input window, operand 5']
    #allocation12 [shape = 's32[2]{0}', space=sflag, size = 0x8, scoped, tag = 'scoped memory for tpu_custom_call.1']
    #allocation13 [shape = 'u8[131072]{0}', space=vmem, size = 0x20000, scoped, tag = 'input window, operand 6']
    #allocation14 [shape = 'u8[131072]{0}', space=vmem, size = 0x20000, scoped, tag = 'output window, operand 0']
    %35 = vsyncpa [#allocation9], 0
    %s36 = scalar_lea.sflag [#allocation9], 1
    %37 = vsyncpa %s36, 0
    %38 = vsyncpa [#allocation12], 0
    %s39 = scalar_lea.sflag [#allocation12], 1
    %40 = vsyncpa %s39, 0
    %41 = vsyncpa [#allocation10], 0
    %s42 = scalar_lea.sflag [#allocation10], 1
    %43 = vsyncpa %s42, 0
    loop: start=0, step=1, limit=8
    $region2: #{tpu_custom_call.1} parent=1 // loop_pre_header
      _
    $region3: #{tpu_custom_call.1} parent=1 // loop_header
      %s45 = sphi 0, %s49
      %p46 = scmp.ge.s32.totalorder %s45, 8
      %s52 = sphi 0, %s64
      %s53 = sphi 0, %s60
      %s54 = sphi 0, %s52
      %s55 = sphi 0, %s53
      %s56 = sphi 0, %s54
      %s57 = sphi 0, %s55
      %s69 = sphi 0, %s71
      %s72 = sphi 0, %s69
      %s73 = sphi 0, %s72
      %s89 = sphi 0, %s73
      %s99 = sphi 0, %s101
      %s102 = sphi 0, %s99
      %s103 = sphi 0, %s102
      %s119 = sphi 0, %s103
      %s129 = sphi 0, %s131
      %s132 = sphi 0, %s129
      %s133 = sphi 0, %s132
      %s149 = sphi 0, %s133
      %s157 = sphi 0, %s159
      %s160 = sphi 0, %s157
      %s161 = sphi 0, %s160
      %s177 = sphi 0, %s161
    $region4: #{tpu_custom_call.1} parent=1 // loop_header_branch
      %48 = sbr.rel (%p46) target = $region8
    $region5: #{tpu_custom_call.1} parent=1 // loop_body
      %s50 = ssub.s32 %s45, 1
      %s51 = ssub.s32 %s45, 2
      %s58 = sadd.s32 1, %s53
      %p59 = scmp.ge.s32.totalorder %s58, 2
      %s60 = scalar_select %p59, 0, %s58
      %s61 = sadd.s32 1, %s52
      %s62 = scalar_select %p59, %s61, %s52
      %p63 = scmp.ge.s32.totalorder %s62, 3
      %s64 = scalar_select %p63, 0, %s62
      %s65 = sld [smem:[#allocation4 + %s52]]
      %s66 = sld [smem:[#allocation4 + %s64]]
      %s67 = ssub.s32 %s65, %s66
      %p68 = scmp.eq.s32.totalorder %s67, 0
      %s70 = sadd.s32 %s69, 1
      %s71 = scalar_select %p68, %s69, %s70
      %p74 = pneg %p68
      %p75 = scmp.eq.s32.totalorder %s45, 5
      %p76 = por %p74, %p75
      %p77 = scmp.ne.s32.totalorder %s69, %s72
      %p78 = scmp.eq.s32.totalorder %s45, 0
      %p79 = por %p77, %p78
      %p80 = scmp.ne.s32.totalorder %s69, %s72
      %p81 = scmp.eq.s32.totalorder %s50, 5
      %p82 = por %p80, %p81
      %p83 = scmp.ne.s32.totalorder %s72, %s73
      %p84 = scmp.eq.s32.totalorder %s50, 0
      %p85 = por %p83, %p84
      %p86 = scmp.ne.s32.totalorder %s72, %s73
      %p87 = scmp.eq.s32.totalorder %s51, 5
      %p88 = por %p86, %p87
      %p90 = scmp.ne.s32.totalorder %s73, %s89
      %p91 = scmp.eq.s32.totalorder %s51, 0
      %p92 = por %p90, %p91
      %s93 = sld [smem:[#allocation5 + %s52]]
      %s94 = sld [smem:[#allocation5 + %s64]]
      %s95 = ssub.s32 %s93, %s94
      %s96 = ssub.s32 %s53, %s60
      %s97 = sor.u32 %s95, %s96
      %p98 = scmp.eq.s32.totalorder %s97, 0
      %s100 = sadd.s32 %s99, 1
      %s101 = scalar_select %p98, %s99, %s100
      %p104 = pneg %p98
      %p105 = scmp.eq.s32.totalorder %s45, 5
      %p106 = por %p104, %p105
      %p107 = scmp.ne.s32.totalorder %s99, %s102
      %p108 = scmp.eq.s32.totalorder %s45, 0
      %p109 = por %p107, %p108
      %p110 = scmp.ne.s32.totalorder %s99, %s102
      %p111 = scmp.eq.s32.totalorder %s50, 5
      %p112 = por %p110, %p111
      %p113 = scmp.ne.s32.totalorder %s102, %s103
      %p114 = scmp.eq.s32.totalorder %s50, 0
      %p115 = por %p113, %p114
      %p116 = scmp.ne.s32.totalorder %s102, %s103
      %p117 = scmp.eq.s32.totalorder %s51, 5
      %p118 = por %p116, %p117
      %p120 = scmp.ne.s32.totalorder %s103, %s119
      %p121 = scmp.eq.s32.totalorder %s51, 0
      %p122 = por %p120, %p121
      %s123 = sld [smem:[#allocation5 + %s52]]
      %s124 = sld [smem:[#allocation5 + %s64]]
      %s125 = ssub.s32 %s123, %s124
      %s126 = ssub.s32 %s53, %s60
      %s127 = sor.u32 %s125, %s126
      %p128 = scmp.eq.s32.totalorder %s127, 0
      %s130 = sadd.s32 %s129, 1
      %s131 = scalar_select %p128, %s129, %s130
      %p134 = pneg %p128
      %p135 = scmp.eq.s32.totalorder %s45, 5
      %p136 = por %p134, %p135
      %p137 = scmp.ne.s32.totalorder %s129, %s132
      %p138 = scmp.eq.s32.totalorder %s45, 0
      %p139 = por %p137, %p138
      %p140 = scmp.ne.s32.totalorder %s129, %s132
      %p141 = scmp.eq.s32.totalorder %s50, 5
      %p142 = por %p140, %p141
      %p143 = scmp.ne.s32.totalorder %s132, %s133
      %p144 = scmp.eq.s32.totalorder %s50, 0
      %p145 = por %p143, %p144
      %p146 = scmp.ne.s32.totalorder %s132, %s133
      %p147 = scmp.eq.s32.totalorder %s51, 5
      %p148 = por %p146, %p147
      %p150 = scmp.ne.s32.totalorder %s133, %s149
      %p151 = scmp.eq.s32.totalorder %s51, 0
      %p152 = por %p150, %p151
      %s153 = sld [smem:[#allocation4 + %s52]]
      %s154 = sld [smem:[#allocation4 + %s64]]
      %s155 = ssub.s32 %s153, %s154
      %p156 = scmp.eq.s32.totalorder %s155, 0
      %s158 = sadd.s32 %s157, 1
      %s159 = scalar_select %p156, %s157, %s158
      %p162 = pneg %p156
      %p163 = scmp.eq.s32.totalorder %s45, 5
      %p164 = por %p162, %p163
      %p165 = scmp.ne.s32.totalorder %s157, %s160
      %p166 = scmp.eq.s32.totalorder %s45, 0
      %p167 = por %p165, %p166
      %p168 = scmp.ne.s32.totalorder %s157, %s160
      %p169 = scmp.eq.s32.totalorder %s50, 5
      %p170 = por %p168, %p169
      %p171 = scmp.ne.s32.totalorder %s160, %s161
      %p172 = scmp.eq.s32.totalorder %s50, 0
      %p173 = por %p171, %p172
      %p174 = scmp.ne.s32.totalorder %s160, %s161
      %p175 = scmp.eq.s32.totalorder %s51, 5
      %p176 = por %p174, %p175
      %p178 = scmp.ne.s32.totalorder %s161, %s177
      %p179 = scmp.eq.s32.totalorder %s51, 0
      %p180 = por %p178, %p179
      %p181 = scmp.le.s32.totalorder 1, %s45
      %p182 = scmp.lt.s32.totalorder %s45, 7
      %p183 = pnand %p181, %p182
      %p184 = pneg %p183
      // Predicated region
      $region9: #{tpu_custom_call.1} parent=5 // pred_check
        _
      $region10: #{tpu_custom_call.1} parent=5 // pred_check_branch
        %186 = sbr.rel (%p183) target = $region12
      $region11: #{tpu_custom_call.1} parent=5 // pred_region
        %s187 = ssub.s32 %s45, 1
      $region12: #{tpu_custom_call.1} parent=5 // pred_fallthru
        _
      %p188 = scmp.lt.s32.totalorder %s45, 6
      // Predicated region
      $region13: #{tpu_custom_call.1} parent=5 // pred_check
        %p189 = pneg %p188
      $region14: #{tpu_custom_call.1} parent=5 // pred_check_branch
        %191 = sbr.rel (%p189) target = $region16
      $region15: #{tpu_custom_call.1} parent=5 // pred_region
        // Predicated region
        $region17: #{tpu_custom_call.1} parent=15 // pred_check
          %p192 = pneg %p79
        $region18: #{tpu_custom_call.1} parent=15 // pred_check_branch
          %194 = sbr.rel (%p192) target = $region20
        $region19: #{tpu_custom_call.1} parent=15 // pred_region
          %s195 = sand.u32 %s69, 1
          %s196 = scalar_lea.sflag [#allocation9], %s195
          %s197 = sand.u32 %s69, 1
          %s198 = smul.addr %s197, 128
          %s199 = scalar_lea.vmem [#allocation8], %s198
          %s200 = sld [smem:[#allocation4 + %s52]]
          %s201 = smul.u32 16, %s200
          %s202 = ssub.s32 29, %s201
          %p203 = scmp.lt.s32.totalorder %s202, 16
          %s204 = scalar_select %p203, %s202, 16
          %s205 = smul.u32 8, %s204
          %s206 = ssub.s32 128, %s205
          %s207 = sshll.u32 %s206, 4
          %208 = vsyncadd %s196, %s207
          %p209 = scmp.ne.s32.totalorder 0, %s205
          %s210 = smul.addr %s201, 8
          %s211 = scalar_lea.hbm %s4, %s210
          %s212 = smul.u32 8, %s204
          %s213 = sshll.u32 %s211, 4
          %s214 = int_to_ptr.hbm [resolvable:$true] %s213
          %s215 = sshll.u32 %s199, 4
          %s216 = int_to_ptr.vmem [resolvable:$true] %s215
          %s217 = sshll.u32 %s212, 4
          %221 = dma.hbm_to_vmem [thread:$0]  (%p209), %s214, %s217, %s216, %s196, 128, 128, 8
        $region20: #{tpu_custom_call.1} parent=15 // pred_fallthru
          _
        // Predicated region
        $region21: #{tpu_custom_call.1} parent=15 // pred_check
          %p222 = pneg %p109
        $region22: #{tpu_custom_call.1} parent=15 // pred_check_branch
          %224 = sbr.rel (%p222) target = $region24
        $region23: #{tpu_custom_call.1} parent=15 // pred_region
          %s225 = sand.u32 %s45, 1
          %s226 = scalar_lea.sflag [#allocation12], %s225
          %s227 = sand.u32 %s99, 1
          %s228 = smul.addr %s227, 128
          %s229 = scalar_lea.vmem [#allocation11], %s228
          %s230 = sld [smem:[#allocation5 + %s52]]
          %232 = vsyncadd %s226, 0
          %s233 = smul.addr %s230, 32
          %s234 = sadd.s32 %s53, %s233
          %s235 = smul.addr %s234, 8
          %s236 = scalar_lea.hbm %s5, %s235
          %s237 = sshll.u32 %s236, 4
          %s238 = int_to_ptr.hbm [resolvable:$true] %s237
          %s239 = sshll.u32 %s229, 4
          %s240 = int_to_ptr.vmem [resolvable:$true] %s239
          %245 = dma.hbm_to_vmem [thread:$0]  %s238, 2048, %s240, %s226, 256, 128, 8
        $region24: #{tpu_custom_call.1} parent=15 // pred_fallthru
          _
        // Predicated region
        $region25: #{tpu_custom_call.1} parent=15 // pred_check
          %p246 = pneg %p139
        $region26: #{tpu_custom_call.1} parent=15 // pred_check_branch
          %248 = sbr.rel (%p246) target = $region28
        $region27: #{tpu_custom_call.1} parent=15 // pred_region
          %s249 = sand.u32 %s45, 1
          %s250 = scalar_lea.sflag [#allocation12], %s249
          %s251 = sand.u32 %s129, 1
          %s252 = smul.addr %s251, 128
          %s253 = scalar_lea.vmem [#allocation13], %s252
          %s254 = sld [smem:[#allocation5 + %s52]]
          %s255 = smul.u32 16, %s53
          %257 = vsyncadd %s250, 0
          %s258 = smul.addr %s254, 32
          %s259 = sadd.s32 %s255, %s258
          %s260 = smul.addr %s259, 8
          %s261 = scalar_lea.hbm %s6, %s260
          %s262 = sshll.u32 %s261, 4
          %s263 = int_to_ptr.hbm [resolvable:$true] %s262
          %s264 = sshll.u32 %s253, 4
          %s265 = int_to_ptr.vmem [resolvable:$true] %s264
          %270 = dma.hbm_to_vmem [thread:$0]  %s263, 2048, %s265, %s250, 128, 128, 8
        $region28: #{tpu_custom_call.1} parent=15 // pred_fallthru
          _
      $region16: #{tpu_custom_call.1} parent=5 // pred_fallthru
        _
      %p271 = scmp.le.s32.totalorder 1, %s45
      %p272 = scmp.lt.s32.totalorder %s45, 7
      %p273 = pnand %p271, %p272
      %p274 = pneg %p273
      // Predicated region
      $region29: #{tpu_custom_call.1} parent=5 // pred_check
        _
      $region30: #{tpu_custom_call.1} parent=5 // pred_check_branch
        %276 = sbr.rel (%p273) target = $region32
      $region31: #{tpu_custom_call.1} parent=5 // pred_region
        %s277 = ssub.s32 %s45, 1
        %s278 = sand.u32 %s72, 1
        %s279 = scalar_lea.sflag [#allocation9], %s278
        %s280 = sand.u32 %s72, 1
        %s281 = smul.addr %s280, 128
        %s282 = scalar_lea.vmem [#allocation8], %s281
        // Predicated region
        $region33: #{tpu_custom_call.1} parent=31 // pred_check
          %p283 = pneg %p85
        $region34: #{tpu_custom_call.1} parent=31 // pred_check_branch
          %285 = sbr.rel (%p283) target = $region36
        $region35: #{tpu_custom_call.1} parent=31 // pred_region
          %287 = dma.done %s279, 2048
        $region36: #{tpu_custom_call.1} parent=31 // pred_fallthru
          _
        %s288 = sand.u32 %s50, 1
        %s289 = scalar_lea.sflag [#allocation12], %s288
        %s290 = sand.u32 %s102, 1
        %s291 = smul.addr %s290, 128
        %s292 = scalar_lea.vmem [#allocation11], %s291
        // Predicated region
        $region37: #{tpu_custom_call.1} parent=31 // pred_check
          %p293 = pneg %p115
        $region38: #{tpu_custom_call.1} parent=31 // pred_check_branch
          %295 = sbr.rel (%p293) target = $region40
        $region39: #{tpu_custom_call.1} parent=31 // pred_region
          %297 = dma.done %s289, 2048
        $region40: #{tpu_custom_call.1} parent=31 // pred_fallthru
          _
        %s298 = sand.u32 %s50, 1
        %s299 = scalar_lea.sflag [#allocation12], %s298
        %s300 = sand.u32 %s132, 1
        %s301 = smul.addr %s300, 128
        %s302 = scalar_lea.vmem [#allocation13], %s301
        // Predicated region
        $region41: #{tpu_custom_call.1} parent=31 // pred_check
          %p303 = pneg %p145
        $region42: #{tpu_custom_call.1} parent=31 // pred_check_branch
          %305 = sbr.rel (%p303) target = $region44
        $region43: #{tpu_custom_call.1} parent=31 // pred_region
          %307 = dma.done %s299, 2048
        $region44: #{tpu_custom_call.1} parent=31 // pred_fallthru
          _
        %s308 = sand.u32 %s72, 1
        %s309 = scalar_lea.sflag [#allocation9], %s308
        %s310 = sand.u32 %s72, 1
        %s311 = smul.addr %s310, 128
        %s312 = scalar_lea.vmem [#allocation8], %s311
        %p313 = pneg %p85
        %p314 = pneg %p82
        %s315 = sand.u32 %s50, 1
        %s316 = scalar_lea.sflag [#allocation12], %s315
        %s317 = sand.u32 %s102, 1
        %s318 = smul.addr %s317, 128
        %s319 = scalar_lea.vmem [#allocation11], %s318
        %p320 = pneg %p115
        %p321 = pneg %p112
        %s322 = sand.u32 %s50, 1
        %s323 = scalar_lea.sflag [#allocation12], %s322
        %s324 = sand.u32 %s132, 1
        %s325 = smul.addr %s324, 128
        %s326 = scalar_lea.vmem [#allocation13], %s325
        %p327 = pneg %p145
        %p328 = pneg %p142
        %p329 = pneg %p173
        %p330 = pneg %p170
        %s331 = sand.u32 %s160, 1
        %s332 = scalar_lea.sflag [#allocation10], %s331
        %s333 = sand.u32 %s160, 1
        %s334 = smul.addr %s333, 128
        %s335 = scalar_lea.vmem [#allocation14], %s334
        %s336 = sld [smem:[#allocation4 + %s54]]
        %s337 = smul.u32 16, %s336
        %s338 = ssub.s32 29, %s337
        %p339 = scmp.lt.s32.totalorder %s338, 16
        %s340 = scalar_select %p339, %s338, 16
        %s341 = smul.u32 8, %s340
        %s342 = sld [smem:[#allocation5 + %s54]]
        %s343 = sld [smem:[#allocation5 + %s54]]
        %s344 = smul.u32 16, %s55
        %s345 = sld [smem:[#allocation4 + %s54]]
        %s346 = smul.u32 16, %s345
        %s347 = ssub.s32 29, %s346
        %p348 = scmp.lt.s32.totalorder %s347, 16
        %s349 = scalar_select %p348, %s347, 16
        %s350 = smul.u32 8, %s349
        %v351 = vld [vmem:[%s282] sm:$0xff]
        %v352 = vld [vmem:[%s282 + $0x8] sm:$0xff]
        %v353 = vld [vmem:[%s282 + $0x10] sm:$0xff]
        %v354 = vld [vmem:[%s282 + $0x18] sm:$0xff]
        %v355 = vld [vmem:[%s282 + $0x20] sm:$0xff]
        %v356 = vld [vmem:[%s282 + $0x28] sm:$0xff]
        %v357 = vld [vmem:[%s282 + $0x30] sm:$0xff]
        %v358 = vld [vmem:[%s282 + $0x38] sm:$0xff]
        %v359 = vld [vmem:[%s282 + $0x40] sm:$0xff]
        %v360 = vld [vmem:[%s282 + $0x48] sm:$0xff]
        %v361 = vld [vmem:[%s282 + $0x50] sm:$0xff]
        %v362 = vld [vmem:[%s282 + $0x58] sm:$0xff]
        %v363 = vld [vmem:[%s282 + $0x60] sm:$0xff]
        %v364 = vld [vmem:[%s282 + $0x68] sm:$0xff]
        %v365 = vld [vmem:[%s282 + $0x70] sm:$0xff]
        %v366 = vld [vmem:[%s282 + $0x78] sm:$0xff]
        %v367 = vld [vmem:[%s292] sm:$0xff]
        %v368 = vld [vmem:[%s292 + $0x8] sm:$0xff]
        %v369 = vld [vmem:[%s292 + $0x10] sm:$0xff]
        %v370 = vld [vmem:[%s292 + $0x18] sm:$0xff]
        %v371 = vld [vmem:[%s292 + $0x20] sm:$0xff]
        %v372 = vld [vmem:[%s292 + $0x28] sm:$0xff]
        %v373 = vld [vmem:[%s292 + $0x30] sm:$0xff]
        %v374 = vld [vmem:[%s292 + $0x38] sm:$0xff]
        %v375 = vld [vmem:[%s292 + $0x40] sm:$0xff]
        %v376 = vld [vmem:[%s292 + $0x48] sm:$0xff]
        %v377 = vld [vmem:[%s292 + $0x50] sm:$0xff]
        %v378 = vld [vmem:[%s292 + $0x58] sm:$0xff]
        %v379 = vld [vmem:[%s292 + $0x60] sm:$0xff]
        %v380 = vld [vmem:[%s292 + $0x68] sm:$0xff]
        %v381 = vld [vmem:[%s292 + $0x70] sm:$0xff]
        %v382 = vld [vmem:[%s292 + $0x78] sm:$0xff]
        %383 = vmatpush.msra.mxu0 %v382
        %384 = vmatpush.msra.mxu0 %v381
        %385 = vmatpush.msra.mxu0 %v380
        %386 = vmatpush.msra.mxu0 %v379
        %387 = vmatpush.msra.mxu0 %v378
        %388 = vmatpush.msra.mxu0 %v377
        %389 = vmatpush.msra.mxu0 %v376
        %390 = vmatpush.msra.mxu0 %v375
        %391 = vmatpush.msra.mxu0 %v374
        %392 = vmatpush.msra.mxu0 %v373
        %393 = vmatpush.msra.mxu0 %v372
        %394 = vmatpush.msra.mxu0 %v371
        %395 = vmatpush.msra.mxu0 %v370
        %396 = vmatpush.msra.mxu0 %v369
        %397 = vmatpush.msra.mxu0 %v368
        %398 = vmatpush.msra.mxu0 %v367
        %399 = vmatmul.f32.gmra.mxu0 %v351
        %v400 = vpop.f32.mrf.mxu0
        %v401 = vadd.f32 0.0, %v400
        %402 = vmatmul.f32.gmra.mxu0 %v352
        %v403 = vpop.f32.mrf.mxu0
        %v404 = vadd.f32 0.0, %v403
        %405 = vmatmul.f32.gmra.mxu0 %v353
        %v406 = vpop.f32.mrf.mxu0
        %v407 = vadd.f32 0.0, %v406
        %408 = vmatmul.f32.gmra.mxu0 %v354
        %v409 = vpop.f32.mrf.mxu0
        %v410 = vadd.f32 0.0, %v409
        %411 = vmatmul.f32.gmra.mxu0 %v355
        %v412 = vpop.f32.mrf.mxu0
        %v413 = vadd.f32 0.0, %v412
        %414 = vmatmul.f32.gmra.mxu0 %v356
        %v415 = vpop.f32.mrf.mxu0
        %v416 = vadd.f32 0.0, %v415
        %417 = vmatmul.f32.gmra.mxu0 %v357
        %v418 = vpop.f32.mrf.mxu0
        %v419 = vadd.f32 0.0, %v418
        %420 = vmatmul.f32.gmra.mxu0 %v358
        %v421 = vpop.f32.mrf.mxu0
        %v422 = vadd.f32 0.0, %v421
        %423 = vmatmul.f32.gmra.mxu0 %v359
        %v424 = vpop.f32.mrf.mxu0
        %v425 = vadd.f32 0.0, %v424
        %426 = vmatmul.f32.gmra.mxu0 %v360
        %v427 = vpop.f32.mrf.mxu0
        %v428 = vadd.f32 0.0, %v427
        %429 = vmatmul.f32.gmra.mxu0 %v361
        %v430 = vpop.f32.mrf.mxu0
        %v431 = vadd.f32 0.0, %v430
        %432 = vmatmul.f32.gmra.mxu0 %v362
        %v433 = vpop.f32.mrf.mxu0
        %v434 = vadd.f32 0.0, %v433
        %435 = vmatmul.f32.gmra.mxu0 %v363
        %v436 = vpop.f32.mrf.mxu0
        %v437 = vadd.f32 0.0, %v436
        %438 = vmatmul.f32.gmra.mxu0 %v364
        %v439 = vpop.f32.mrf.mxu0
        %v440 = vadd.f32 0.0, %v439
        %441 = vmatmul.f32.gmra.mxu0 %v365
        %v442 = vpop.f32.mrf.mxu0
        %v443 = vadd.f32 0.0, %v442
        %444 = vmatmul.f32.gmra.mxu0 %v366
        %v445 = vpop.f32.mrf.mxu0
        %v446 = vadd.f32 0.0, %v445
        %447 = vdwg.mxu0
        %v448 = vmul.f32 %v401, %v401
        %v449 = vmul.f32 %v404, %v404
        %v450 = vmul.f32 %v407, %v407
        %v451 = vmul.f32 %v410, %v410
        %v452 = vmul.f32 %v413, %v413
        %v453 = vmul.f32 %v416, %v416
        %v454 = vmul.f32 %v419, %v419
        %v455 = vmul.f32 %v422, %v422
        %v456 = vmul.f32 %v425, %v425
        %v457 = vmul.f32 %v428, %v428
        %v458 = vmul.f32 %v431, %v431
        %v459 = vmul.f32 %v434, %v434
        %v460 = vmul.f32 %v437, %v437
        %v461 = vmul.f32 %v440, %v440
        %v462 = vmul.f32 %v443, %v443
        %v463 = vmul.f32 %v446, %v446
        %v464 = vmul.f32 %v401, %v448
        %v465 = vmul.f32 %v404, %v449
        %v466 = vmul.f32 %v407, %v450
        %v467 = vmul.f32 %v410, %v451
        %v468 = vmul.f32 %v413, %v452
        %v469 = vmul.f32 %v416, %v453
        %v470 = vmul.f32 %v419, %v454
        %v471 = vmul.f32 %v422, %v455
        %v472 = vmul.f32 %v425, %v456
        %v473 = vmul.f32 %v428, %v457
        %v474 = vmul.f32 %v431, %v458
        %v475 = vmul.f32 %v434, %v459
        %v476 = vmul.f32 %v437, %v460
        %v477 = vmul.f32 %v440, %v461
        %v478 = vmul.f32 %v443, %v462
        %v479 = vmul.f32 %v446, %v463
        %v480 = vmul.f32 %v464, 0.044715
        %v481 = vmul.f32 %v465, 0.044715
        %v482 = vmul.f32 %v466, 0.044715
        %v483 = vmul.f32 %v467, 0.044715
        %v484 = vmul.f32 %v468, 0.044715
        %v485 = vmul.f32 %v469, 0.044715
        %v486 = vmul.f32 %v470, 0.044715
        %v487 = vmul.f32 %v471, 0.044715
        %v488 = vmul.f32 %v472, 0.044715
        %v489 = vmul.f32 %v473, 0.044715
        %v490 = vmul.f32 %v474, 0.044715
        %v491 = vmul.f32 %v475, 0.044715
        %v492 = vmul.f32 %v476, 0.044715
        %v493 = vmul.f32 %v477, 0.044715
        %v494 = vmul.f32 %v478, 0.044715
        %v495 = vmul.f32 %v479, 0.044715
        %v496 = vadd.f32 %v401, %v480
        %v497 = vadd.f32 %v404, %v481
        %v498 = vadd.f32 %v407, %v482
        %v499 = vadd.f32 %v410, %v483
        %v500 = vadd.f32 %v413, %v484
        %v501 = vadd.f32 %v416, %v485
        %v502 = vadd.f32 %v419, %v486
        %v503 = vadd.f32 %v422, %v487
        %v504 = vadd.f32 %v425, %v488
        %v505 = vadd.f32 %v428, %v489
        %v506 = vadd.f32 %v431, %v490
        %v507 = vadd.f32 %v434, %v491
        %v508 = vadd.f32 %v437, %v492
        %v509 = vadd.f32 %v440, %v493
        %v510 = vadd.f32 %v443, %v494
        %v511 = vadd.f32 %v446, %v495
        %v512 = vmul.f32 %v496, 0.7978846
        %v513 = vmul.f32 %v497, 0.7978846
        %v514 = vmul.f32 %v498, 0.7978846
        %v515 = vmul.f32 %v499, 0.7978846
        %v516 = vmul.f32 %v500, 0.7978846
        %v517 = vmul.f32 %v501, 0.7978846
        %v518 = vmul.f32 %v502, 0.7978846
        %v519 = vmul.f32 %v503, 0.7978846
        %v520 = vmul.f32 %v504, 0.7978846
        %v521 = vmul.f32 %v505, 0.7978846
        %v522 = vmul.f32 %v506, 0.7978846
        %v523 = vmul.f32 %v507, 0.7978846
        %v524 = vmul.f32 %v508, 0.7978846
        %v525 = vmul.f32 %v509, 0.7978846
        %v526 = vmul.f32 %v510, 0.7978846
        %v527 = vmul.f32 %v511, 0.7978846
        %v528 = vtanh.pop %v512
        %v529 = vtanh.pop %v513
        %v530 = vtanh.pop %v514
        %v531 = vtanh.pop %v515
        %v532 = vtanh.pop %v516
        %v533 = vtanh.pop %v517
        %v534 = vtanh.pop %v518
        %v535 = vtanh.pop %v519
        %v536 = vtanh.pop %v520
        %v537 = vtanh.pop %v521
        %v538 = vtanh.pop %v522
        %v539 = vtanh.pop %v523
        %v540 = vtanh.pop %v524
        %v541 = vtanh.pop %v525
        %v542 = vtanh.pop %v526
        %v543 = vtanh.pop %v527
        %v544 = vadd.f32 %v528, 1.0
        %v545 = vadd.f32 %v529, 1.0
        %v546 = vadd.f32 %v530, 1.0
        %v547 = vadd.f32 %v531, 1.0
        %v548 = vadd.f32 %v532, 1.0
        %v549 = vadd.f32 %v533, 1.0
        %v550 = vadd.f32 %v534, 1.0
        %v551 = vadd.f32 %v535, 1.0
        %v552 = vadd.f32 %v536, 1.0
        %v553 = vadd.f32 %v537, 1.0
        %v554 = vadd.f32 %v538, 1.0
        %v555 = vadd.f32 %v539, 1.0
        %v556 = vadd.f32 %v540, 1.0
        %v557 = vadd.f32 %v541, 1.0
        %v558 = vadd.f32 %v542, 1.0
        %v559 = vadd.f32 %v543, 1.0
        %v560 = vmul.f32 %v544, 0.5
        %v561 = vmul.f32 %v545, 0.5
        %v562 = vmul.f32 %v546, 0.5
        %v563 = vmul.f32 %v547, 0.5
        %v564 = vmul.f32 %v548, 0.5
        %v565 = vmul.f32 %v549, 0.5
        %v566 = vmul.f32 %v550, 0.5
        %v567 = vmul.f32 %v551, 0.5
        %v568 = vmul.f32 %v552, 0.5
        %v569 = vmul.f32 %v553, 0.5
        %v570 = vmul.f32 %v554, 0.5
        %v571 = vmul.f32 %v555, 0.5
        %v572 = vmul.f32 %v556, 0.5
        %v573 = vmul.f32 %v557, 0.5
        %v574 = vmul.f32 %v558, 0.5
        %v575 = vmul.f32 %v559, 0.5
        %v576 = vmul.f32 %v401, %v560
        %v577 = vmul.f32 %v404, %v561
        %v578 = vmul.f32 %v407, %v562
        %v579 = vmul.f32 %v410, %v563
        %v580 = vmul.f32 %v413, %v564
        %v581 = vmul.f32 %v416, %v565
        %v582 = vmul.f32 %v419, %v566
        %v583 = vmul.f32 %v422, %v567
        %v584 = vmul.f32 %v425, %v568
        %v585 = vmul.f32 %v428, %v569
        %v586 = vmul.f32 %v431, %v570
        %v587 = vmul.f32 %v434, %v571
        %v588 = vmul.f32 %v437, %v572
        %v589 = vmul.f32 %v440, %v573
        %v590 = vmul.f32 %v443, %v574
        %v591 = vmul.f32 %v446, %v575
        %v592 = vld [vmem:[%s302] sm:$0xff]
        %v593 = vld [vmem:[%s302 + $0x8] sm:$0xff]
        %v594 = vld [vmem:[%s302 + $0x10] sm:$0xff]
        %v595 = vld [vmem:[%s302 + $0x18] sm:$0xff]
        %v596 = vld [vmem:[%s302 + $0x20] sm:$0xff]
        %v597 = vld [vmem:[%s302 + $0x28] sm:$0xff]
        %v598 = vld [vmem:[%s302 + $0x30] sm:$0xff]
        %v599 = vld [vmem:[%s302 + $0x38] sm:$0xff]
        %v600 = vld [vmem:[%s302 + $0x40] sm:$0xff]
        %v601 = vld [vmem:[%s302 + $0x48] sm:$0xff]
        %v602 = vld [vmem:[%s302 + $0x50] sm:$0xff]
        %v603 = vld [vmem:[%s302 + $0x58] sm:$0xff]
        %v604 = vld [vmem:[%s302 + $0x60] sm:$0xff]
        %v605 = vld [vmem:[%s302 + $0x68] sm:$0xff]
        %v606 = vld [vmem:[%s302 + $0x70] sm:$0xff]
        %v607 = vld [vmem:[%s302 + $0x78] sm:$0xff]
        %608 = vmatpush.msra.mxu0 %v607
        %609 = vmatpush.msra.mxu0 %v606
        %610 = vmatpush.msra.mxu0 %v605
        %611 = vmatpush.msra.mxu0 %v604
        %612 = vmatpush.msra.mxu0 %v603
        %613 = vmatpush.msra.mxu0 %v602
        %614 = vmatpush.msra.mxu0 %v601
        %615 = vmatpush.msra.mxu0 %v600
        %616 = vmatpush.msra.mxu0 %v599
        %617 = vmatpush.msra.mxu0 %v598
        %618 = vmatpush.msra.mxu0 %v597
        %619 = vmatpush.msra.mxu0 %v596
        %620 = vmatpush.msra.mxu0 %v595
        %621 = vmatpush.msra.mxu0 %v594
        %622 = vmatpush.msra.mxu0 %v593
        %623 = vmatpush.msra.mxu0 %v592
        %624 = vmatmul.f32.gmra.mxu0 %v576
        %v625 = vpop.f32.mrf.mxu0
        %v626 = vadd.f32 0.0, %v625
        %627 = vmatmul.f32.gmra.mxu0 %v577
        %v628 = vpop.f32.mrf.mxu0
        %v629 = vadd.f32 0.0, %v628
        %630 = vmatmul.f32.gmra.mxu0 %v578
        %v631 = vpop.f32.mrf.mxu0
        %v632 = vadd.f32 0.0, %v631
        %633 = vmatmul.f32.gmra.mxu0 %v579
        %v634 = vpop.f32.mrf.mxu0
        %v635 = vadd.f32 0.0, %v634
        %636 = vmatmul.f32.gmra.mxu0 %v580
        %v637 = vpop.f32.mrf.mxu0
        %v638 = vadd.f32 0.0, %v637
        %639 = vmatmul.f32.gmra.mxu0 %v581
        %v640 = vpop.f32.mrf.mxu0
        %v641 = vadd.f32 0.0, %v640
        %642 = vmatmul.f32.gmra.mxu0 %v582
        %v643 = vpop.f32.mrf.mxu0
        %v644 = vadd.f32 0.0, %v643
        %645 = vmatmul.f32.gmra.mxu0 %v583
        %v646 = vpop.f32.mrf.mxu0
        %v647 = vadd.f32 0.0, %v646
        %648 = vmatmul.f32.gmra.mxu0 %v584
        %v649 = vpop.f32.mrf.mxu0
        %v650 = vadd.f32 0.0, %v649
        %651 = vmatmul.f32.gmra.mxu0 %v585
        %v652 = vpop.f32.mrf.mxu0
        %v653 = vadd.f32 0.0, %v652
        %654 = vmatmul.f32.gmra.mxu0 %v586
        %v655 = vpop.f32.mrf.mxu0
        %v656 = vadd.f32 0.0, %v655
        %657 = vmatmul.f32.gmra.mxu0 %v587
        %v658 = vpop.f32.mrf.mxu0
        %v659 = vadd.f32 0.0, %v658
        %660 = vmatmul.f32.gmra.mxu0 %v588
        %v661 = vpop.f32.mrf.mxu0
        %v662 = vadd.f32 0.0, %v661
        %663 = vmatmul.f32.gmra.mxu0 %v589
        %v664 = vpop.f32.mrf.mxu0
        %v665 = vadd.f32 0.0, %v664
        %666 = vmatmul.f32.gmra.mxu0 %v590
        %v667 = vpop.f32.mrf.mxu0
        %v668 = vadd.f32 0.0, %v667
        %669 = vmatmul.f32.gmra.mxu0 %v591
        %v670 = vpop.f32.mrf.mxu0
        %v671 = vadd.f32 0.0, %v670
        %672 = vdwg.mxu0
        %p673 = scmp.eq.s32.totalorder %s55, 0
        // Predicated region
        $region45: #{tpu_custom_call.1} parent=31 // pred_check
          %p674 = pneg %p673
        $region46: #{tpu_custom_call.1} parent=31 // pred_check_branch
          %676 = sbr.rel (%p674) target = $region48
        $region47: #{tpu_custom_call.1} parent=31 // pred_region
          %677 = vst [vmem:[#allocation2] sm:$0xff] 0.0
          %678 = vst [vmem:[#allocation2 + $0x8] sm:$0xff] 0.0
          %679 = vst [vmem:[#allocation2 + $0x10] sm:$0xff] 0.0
          %680 = vst [vmem:[#allocation2 + $0x18] sm:$0xff] 0.0
          %681 = vst [vmem:[#allocation2 + $0x20] sm:$0xff] 0.0
          %682 = vst [vmem:[#allocation2 + $0x28] sm:$0xff] 0.0
          %683 = vst [vmem:[#allocation2 + $0x30] sm:$0xff] 0.0
          %684 = vst [vmem:[#allocation2 + $0x38] sm:$0xff] 0.0
          %685 = vst [vmem:[#allocation2 + $0x40] sm:$0xff] 0.0
          %686 = vst [vmem:[#allocation2 + $0x48] sm:$0xff] 0.0
          %687 = vst [vmem:[#allocation2 + $0x50] sm:$0xff] 0.0
          %688 = vst [vmem:[#allocation2 + $0x58] sm:$0xff] 0.0
          %689 = vst [vmem:[#allocation2 + $0x60] sm:$0xff] 0.0
          %690 = vst [vmem:[#allocation2 + $0x68] sm:$0xff] 0.0
          %691 = vst [vmem:[#allocation2 + $0x70] sm:$0xff] 0.0
          %692 = vst [vmem:[#allocation2 + $0x78] sm:$0xff] 0.0
        $region48: #{tpu_custom_call.1} parent=31 // pred_fallthru
          _
        %v693 = vld [vmem:[#allocation2] sm:$0xff]
        %v694 = vld [vmem:[#allocation2 + $0x8] sm:$0xff]
        %v695 = vld [vmem:[#allocation2 + $0x10] sm:$0xff]
        %v696 = vld [vmem:[#allocation2 + $0x18] sm:$0xff]
        %v697 = vld [vmem:[#allocation2 + $0x20] sm:$0xff]
        %v698 = vld [vmem:[#allocation2 + $0x28] sm:$0xff]
        %v699 = vld [vmem:[#allocation2 + $0x30] sm:$0xff]
        %v700 = vld [vmem:[#allocation2 + $0x38] sm:$0xff]
        %v701 = vld [vmem:[#allocation2 + $0x40] sm:$0xff]
        %v702 = vld [vmem:[#allocation2 + $0x48] sm:$0xff]
        %v703 = vld [vmem:[#allocation2 + $0x50] sm:$0xff]
        %v704 = vld [vmem:[#allocation2 + $0x58] sm:$0xff]
        %v705 = vld [vmem:[#allocation2 + $0x60] sm:$0xff]
        %v706 = vld [vmem:[#allocation2 + $0x68] sm:$0xff]
        %v707 = vld [vmem:[#allocation2 + $0x70] sm:$0xff]
        %v708 = vld [vmem:[#allocation2 + $0x78] sm:$0xff]
        %v709 = vadd.f32 %v693, %v626
        %v710 = vadd.f32 %v694, %v629
        %v711 = vadd.f32 %v695, %v632
        %v712 = vadd.f32 %v696, %v635
        %v713 = vadd.f32 %v697, %v638
        %v714 = vadd.f32 %v698, %v641
        %v715 = vadd.f32 %v699, %v644
        %v716 = vadd.f32 %v700, %v647
        %v717 = vadd.f32 %v701, %v650
        %v718 = vadd.f32 %v702, %v653
        %v719 = vadd.f32 %v703, %v656
        %v720 = vadd.f32 %v704, %v659
        %v721 = vadd.f32 %v705, %v662
        %v722 = vadd.f32 %v706, %v665
        %v723 = vadd.f32 %v707, %v668
        %v724 = vadd.f32 %v708, %v671
        %725 = vst [vmem:[#allocation2] sm:$0xff] %v709
        %726 = vst [vmem:[#allocation2 + $0x8] sm:$0xff] %v710
        %727 = vst [vmem:[#allocation2 + $0x10] sm:$0xff] %v711
        %728 = vst [vmem:[#allocation2 + $0x18] sm:$0xff] %v712
        %729 = vst [vmem:[#allocation2 + $0x20] sm:$0xff] %v713
        %730 = vst [vmem:[#allocation2 + $0x28] sm:$0xff] %v714
        %731 = vst [vmem:[#allocation2 + $0x30] sm:$0xff] %v715
        %732 = vst [vmem:[#allocation2 + $0x38] sm:$0xff] %v716
        %733 = vst [vmem:[#allocation2 + $0x40] sm:$0xff] %v717
        %734 = vst [vmem:[#allocation2 + $0x48] sm:$0xff] %v718
        %735 = vst [vmem:[#allocation2 + $0x50] sm:$0xff] %v719
        %736 = vst [vmem:[#allocation2 + $0x58] sm:$0xff] %v720
        %737 = vst [vmem:[#allocation2 + $0x60] sm:$0xff] %v721
        %738 = vst [vmem:[#allocation2 + $0x68] sm:$0xff] %v722
        %739 = vst [vmem:[#allocation2 + $0x70] sm:$0xff] %v723
        %740 = vst [vmem:[#allocation2 + $0x78] sm:$0xff] %v724
        %p741 = scmp.eq.s32.totalorder %s55, 1
        // Predicated region
        $region49: #{tpu_custom_call.1} parent=31 // pred_check
          %p742 = pneg %p741
        $region50: #{tpu_custom_call.1} parent=31 // pred_check_branch
          %744 = sbr.rel (%p742) target = $region52
        $region51: #{tpu_custom_call.1} parent=31 // pred_region
          %v745 = vld [vmem:[#allocation2] sm:$0xff]
          %v746 = vld [vmem:[#allocation2 + $0x8] sm:$0xff]
          %v747 = vld [vmem:[#allocation2 + $0x10] sm:$0xff]
          %v748 = vld [vmem:[#allocation2 + $0x18] sm:$0xff]
          %v749 = vld [vmem:[#allocation2 + $0x20] sm:$0xff]
          %v750 = vld [vmem:[#allocation2 + $0x28] sm:$0xff]
          %v751 = vld [vmem:[#allocation2 + $0x30] sm:$0xff]
          %v752 = vld [vmem:[#allocation2 + $0x38] sm:$0xff]
          %v753 = vld [vmem:[#allocation2 + $0x40] sm:$0xff]
          %v754 = vld [vmem:[#allocation2 + $0x48] sm:$0xff]
          %v755 = vld [vmem:[#allocation2 + $0x50] sm:$0xff]
          %v756 = vld [vmem:[#allocation2 + $0x58] sm:$0xff]
          %v757 = vld [vmem:[#allocation2 + $0x60] sm:$0xff]
          %v758 = vld [vmem:[#allocation2 + $0x68] sm:$0xff]
          %v759 = vld [vmem:[#allocation2 + $0x70] sm:$0xff]
          %v760 = vld [vmem:[#allocation2 + $0x78] sm:$0xff]
          %v761 = vlaneseq
          %v762 = vshrl.u32 %v761, 7
          %v763 = vadd.s32 %v762, 8
          %v764 = vadd.s32 %v762, 16
          %v765 = vadd.s32 %v762, 24
          %v766 = vadd.s32 %v762, 32
          %v767 = vadd.s32 %v762, 40
          %v768 = vadd.s32 %v762, 48
          %v769 = vadd.s32 %v762, 56
          %v770 = vadd.s32 %v762, 64
          %v771 = vadd.s32 %v762, 72
          %v772 = vadd.s32 %v762, 80
          %v773 = vadd.s32 %v762, 88
          %v774 = vadd.s32 %v762, 96
          %v775 = vadd.s32 %v762, 104
          %v776 = vadd.s32 %v762, 112
          %v777 = vadd.s32 %v762, 120
          %s778 = sld [smem:[#allocation6 + %s54]]
          %v779 = vstv %s778
          %vm780 = vcmp.ge.s32.totalorder %v762, %v779
          %vm781 = vcmp.ge.s32.totalorder %v763, %v779
          %vm782 = vcmp.ge.s32.totalorder %v764, %v779
          %vm783 = vcmp.ge.s32.totalorder %v765, %v779
          %vm784 = vcmp.ge.s32.totalorder %v766, %v779
          %vm785 = vcmp.ge.s32.totalorder %v767, %v779
          %vm786 = vcmp.ge.s32.totalorder %v768, %v779
          %vm787 = vcmp.ge.s32.totalorder %v769, %v779
          %vm788 = vcmp.ge.s32.totalorder %v770, %v779
          %vm789 = vcmp.ge.s32.totalorder %v771, %v779
          %vm790 = vcmp.ge.s32.totalorder %v772, %v779
          %vm791 = vcmp.ge.s32.totalorder %v773, %v779
          %vm792 = vcmp.ge.s32.totalorder %v774, %v779
          %vm793 = vcmp.ge.s32.totalorder %v775, %v779
          %vm794 = vcmp.ge.s32.totalorder %v776, %v779
          %vm795 = vcmp.ge.s32.totalorder %v777, %v779
          %s796 = sld [smem:[#allocation7 + %s54]]
          %v797 = vstv %s796
          %vm798 = vcmp.lt.s32.totalorder %v762, %v797
          %vm799 = vcmp.lt.s32.totalorder %v763, %v797
          %vm800 = vcmp.lt.s32.totalorder %v764, %v797
          %vm801 = vcmp.lt.s32.totalorder %v765, %v797
          %vm802 = vcmp.lt.s32.totalorder %v766, %v797
          %vm803 = vcmp.lt.s32.totalorder %v767, %v797
          %vm804 = vcmp.lt.s32.totalorder %v768, %v797
          %vm805 = vcmp.lt.s32.totalorder %v769, %v797
          %vm806 = vcmp.lt.s32.totalorder %v770, %v797
          %vm807 = vcmp.lt.s32.totalorder %v771, %v797
          %vm808 = vcmp.lt.s32.totalorder %v772, %v797
          %vm809 = vcmp.lt.s32.totalorder %v773, %v797
          %vm810 = vcmp.lt.s32.totalorder %v774, %v797
          %vm811 = vcmp.lt.s32.totalorder %v775, %v797
          %vm812 = vcmp.lt.s32.totalorder %v776, %v797
          %vm813 = vcmp.lt.s32.totalorder %v777, %v797
          %vm814 = vmand %vm780, %vm798
          %vm815 = vmand %vm781, %vm799
          %vm816 = vmand %vm782, %vm800
          %vm817 = vmand %vm783, %vm801
          %vm818 = vmand %vm784, %vm802
          %vm819 = vmand %vm785, %vm803
          %vm820 = vmand %vm786, %vm804
          %vm821 = vmand %vm787, %vm805
          %vm822 = vmand %vm788, %vm806
          %vm823 = vmand %vm789, %vm807
          %vm824 = vmand %vm790, %vm808
          %vm825 = vmand %vm791, %vm809
          %vm826 = vmand %vm792, %vm810
          %vm827 = vmand %vm793, %vm811
          %vm828 = vmand %vm794, %vm812
          %vm829 = vmand %vm795, %vm813
          %v830 = vld [vmem:[%s335] sm:$0xff]
          %v831 = vld [vmem:[%s335 + $0x8] sm:$0xff]
          %v832 = vld [vmem:[%s335 + $0x10] sm:$0xff]
          %v833 = vld [vmem:[%s335 + $0x18] sm:$0xff]
          %v834 = vld [vmem:[%s335 + $0x20] sm:$0xff]
          %v835 = vld [vmem:[%s335 + $0x28] sm:$0xff]
          %v836 = vld [vmem:[%s335 + $0x30] sm:$0xff]
          %v837 = vld [vmem:[%s335 + $0x38] sm:$0xff]
          %v838 = vld [vmem:[%s335 + $0x40] sm:$0xff]
          %v839 = vld [vmem:[%s335 + $0x48] sm:$0xff]
          %v840 = vld [vmem:[%s335 + $0x50] sm:$0xff]
          %v841 = vld [vmem:[%s335 + $0x58] sm:$0xff]
          %v842 = vld [vmem:[%s335 + $0x60] sm:$0xff]
          %v843 = vld [vmem:[%s335 + $0x68] sm:$0xff]
          %v844 = vld [vmem:[%s335 + $0x70] sm:$0xff]
          %v845 = vld [vmem:[%s335 + $0x78] sm:$0xff]
          %v846 = vsel %vm814, 1, 0
          %v847 = vsel %vm815, 1, 0
          %v848 = vsel %vm816, 1, 0
          %v849 = vsel %vm817, 1, 0
          %v850 = vsel %vm818, 1, 0
          %v851 = vsel %vm819, 1, 0
          %v852 = vsel %vm820, 1, 0
          %v853 = vsel %vm821, 1, 0
          %v854 = vsel %vm822, 1, 0
          %v855 = vsel %vm823, 1, 0
          %v856 = vsel %vm824, 1, 0
          %v857 = vsel %vm825, 1, 0
          %v858 = vsel %vm826, 1, 0
          %v859 = vsel %vm827, 1, 0
          %v860 = vsel %vm828, 1, 0
          %v861 = vsel %vm829, 1, 0
          %vm862 = vcmp.eq.s32.totalorder %v846, 1
          %vm863 = vcmp.eq.s32.totalorder %v847, 1
          %vm864 = vcmp.eq.s32.totalorder %v848, 1
          %vm865 = vcmp.eq.s32.totalorder %v849, 1
          %vm866 = vcmp.eq.s32.totalorder %v850, 1
          %vm867 = vcmp.eq.s32.totalorder %v851, 1
          %vm868 = vcmp.eq.s32.totalorder %v852, 1
          %vm869 = vcmp.eq.s32.totalorder %v853, 1
          %vm870 = vcmp.eq.s32.totalorder %v854, 1
          %vm871 = vcmp.eq.s32.totalorder %v855, 1
          %vm872 = vcmp.eq.s32.totalorder %v856, 1
          %vm873 = vcmp.eq.s32.totalorder %v857, 1
          %vm874 = vcmp.eq.s32.totalorder %v858, 1
          %vm875 = vcmp.eq.s32.totalorder %v859, 1
          %vm876 = vcmp.eq.s32.totalorder %v860, 1
          %vm877 = vcmp.eq.s32.totalorder %v861, 1
          %v878 = vsel %vm862, %v745, %v830
          %v879 = vsel %vm863, %v746, %v831
          %v880 = vsel %vm864, %v747, %v832
          %v881 = vsel %vm865, %v748, %v833
          %v882 = vsel %vm866, %v749, %v834
          %v883 = vsel %vm867, %v750, %v835
          %v884 = vsel %vm868, %v751, %v836
          %v885 = vsel %vm869, %v752, %v837
          %v886 = vsel %vm870, %v753, %v838
          %v887 = vsel %vm871, %v754, %v839
          %v888 = vsel %vm872, %v755, %v840
          %v889 = vsel %vm873, %v756, %v841
          %v890 = vsel %vm874, %v757, %v842
          %v891 = vsel %vm875, %v758, %v843
          %v892 = vsel %vm876, %v759, %v844
          %v893 = vsel %vm877, %v760, %v845
          %894 = vst [vmem:[%s335] sm:$0xff] %v878
          %895 = vst [vmem:[%s335 + $0x8] sm:$0xff] %v879
          %896 = vst [vmem:[%s335 + $0x10] sm:$0xff] %v880
          %897 = vst [vmem:[%s335 + $0x18] sm:$0xff] %v881
          %898 = vst [vmem:[%s335 + $0x20] sm:$0xff] %v882
          %899 = vst [vmem:[%s335 + $0x28] sm:$0xff] %v883
          %900 = vst [vmem:[%s335 + $0x30] sm:$0xff] %v884
          %901 = vst [vmem:[%s335 + $0x38] sm:$0xff] %v885
          %902 = vst [vmem:[%s335 + $0x40] sm:$0xff] %v886
          %903 = vst [vmem:[%s335 + $0x48] sm:$0xff] %v887
          %904 = vst [vmem:[%s335 + $0x50] sm:$0xff] %v888
          %905 = vst [vmem:[%s335 + $0x58] sm:$0xff] %v889
          %906 = vst [vmem:[%s335 + $0x60] sm:$0xff] %v890
          %907 = vst [vmem:[%s335 + $0x68] sm:$0xff] %v891
          %908 = vst [vmem:[%s335 + $0x70] sm:$0xff] %v892
          %909 = vst [vmem:[%s335 + $0x78] sm:$0xff] %v893
        $region52: #{tpu_custom_call.1} parent=31 // pred_fallthru
          _
        %s910 = sand.u32 %s160, 1
        %s911 = scalar_lea.sflag [#allocation10], %s910
        %s912 = sand.u32 %s160, 1
        %s913 = smul.addr %s912, 128
        %s914 = scalar_lea.vmem [#allocation14], %s913
        // Predicated region
        $region53: #{tpu_custom_call.1} parent=31 // pred_check
          %p915 = pneg %p170
        $region54: #{tpu_custom_call.1} parent=31 // pred_check_branch
          %917 = sbr.rel (%p915) target = $region56
        $region55: #{tpu_custom_call.1} parent=31 // pred_region
          %s918 = sld [smem:[#allocation4 + %s54]]
          %s919 = smul.u32 16, %s918
          %s920 = ssub.s32 29, %s919
          %p921 = scmp.lt.s32.totalorder %s920, 16
          %s922 = scalar_select %p921, %s920, 16
          %s923 = smul.u32 8, %s922
          %s924 = ssub.s32 128, %s923
          %s925 = sshll.u32 %s924, 4
          %926 = vsyncadd %s911, %s925
          %p927 = scmp.ne.s32.totalorder 0, %s923
          %s928 = smul.addr %s919, 8
          %s929 = scalar_lea.hbm %s7, %s928
          %s930 = smul.u32 8, %s922
          %s931 = sshll.u32 %s914, 4
          %s932 = int_to_ptr.vmem [resolvable:$true] %s931
          %s933 = sshll.u32 %s929, 4
          %s934 = int_to_ptr.hbm [resolvable:$true] %s933
          %s935 = sshll.u32 %s930, 4
          %939 = dma.vmem_to_hbm [thread:$0]  (%p927), %s932, %s935, %s934, %s911, 128, 128, 8
        $region56: #{tpu_custom_call.1} parent=31 // pred_fallthru
          _
      $region32: #{tpu_custom_call.1} parent=5 // pred_fallthru
        _
      %p940 = scmp.le.s32.totalorder 2, %s45
      // Predicated region
      $region57: #{tpu_custom_call.1} parent=5 // pred_check
        %p941 = pneg %p940
      $region58: #{tpu_custom_call.1} parent=5 // pred_check_branch
        %943 = sbr.rel (%p941) target = $region60
      $region59: #{tpu_custom_call.1} parent=5 // pred_region
        %s944 = ssub.s32 %s45, 2
        // Predicated region
        $region61: #{tpu_custom_call.1} parent=59 // pred_check
          %p945 = pneg %p176
        $region62: #{tpu_custom_call.1} parent=59 // pred_check_branch
          %947 = sbr.rel (%p945) target = $region64
        $region63: #{tpu_custom_call.1} parent=59 // pred_region
          %s948 = sand.u32 %s161, 1
          %s949 = scalar_lea.sflag [#allocation10], %s948
          %s950 = sand.u32 %s161, 1
          %s951 = smul.addr %s950, 128
          %s952 = scalar_lea.vmem [#allocation14], %s951
          %954 = dma.done %s949, 2048
        $region64: #{tpu_custom_call.1} parent=59 // pred_fallthru
          _
      $region60: #{tpu_custom_call.1} parent=5 // pred_fallthru
        _
    $region6: #{tpu_custom_call.1} parent=1 // loop_footer
      %s49 = sadd.s32 1, %s45
    $region7: #{tpu_custom_call.1} parent=1 // loop_footer_branch
      %44 = sbr.rel target = $region3
    $region8: #{tpu_custom_call.1} parent=1 // loop_exit
      _
    %955 = vsyncpa [#allocation9], 1
    %s956 = scalar_lea.sflag [#allocation9], 1
    %957 = vsyncpa %s956, 1
    %958 = vsyncpa [#allocation12], 1
    %s959 = scalar_lea.sflag [#allocation12], 1
    %960 = vsyncpa %s959, 1
    %961 = vsyncpa [#allocation10], 1
    %s962 = scalar_lea.sflag [#allocation10], 1
    %963 = vsyncpa %s962, 1

</llo_original>
